<compile_context>
chip_gen: v6e
topology: v6e:2x2x1
jax: 0.10.0
libtpu: 0.0.40
codegen_flags: <defaults>
</compile_context>

<pallas_src>
import functools

import jax
import jax.numpy as jnp
from jax import lax
from jax.experimental import pallas as pl
from jax.experimental.pallas import tpu as pltpu

D_CON = 256  # width of con_head_dense / con_tail_dense (hardcoded in the module)


def pointer_net_kernel(emb_ref, w_ref, b_ref, ptr_ref, con_ref, *, d, l):
    """One grid step == one batch element.

    emb_ref: (S, H)     bf16, rows b*S:(b+1)*S of the flattened embedding
    w_ref  : (H, Wtot)  bf16 fused [Wh | Wt | Wp_pad]; VMEM-resident across steps
    b_ref  : (1, Wtot)  f32 fused bias (tiny; kept f32 for accuracy)
    ptr_ref: (1, S, L)  f32 sigmoid(pointer_dense(emb))
    con_ref: (1, S, S)  f32 sigmoid(start @ end^T)
    """
    e = emb_ref[...]

    # One fused projection; columns = [start (d) | end (d) | pointer (pad)].
    # Slices below are static and lane-aligned (multiples of 128).
    proj = jnp.dot(e, w_ref[...], preferred_element_type=jnp.float32)
    proj = proj + b_ref[...]                                # (S, Wtot) f32

    start = proj[:, :d]                                     # (S, D)
    end = proj[:, d:2 * d]                                  # (S, D)
    ptr_logits = proj[:, 2 * d:2 * d + l]                   # (S, L)

    # L is tiny -> a handful of masked stores; avoids a padded-slab HBM round trip.
    ptr_ref[0] = jax.nn.sigmoid(ptr_logits).astype(ptr_ref.dtype)

    # start @ end^T : contract dim 1 of both operands (no explicit transposed
    # temporary on our side). Kept in f32 since it feeds sigmoid directly.
    scores = lax.dot_general(
        start, end,
        dimension_numbers=(((1,), (1,)), ((), ())),
        preferred_element_type=jnp.float32)                 # (S, S)
    con_ref[0] = jax.nn.sigmoid(scores).astype(con_ref.dtype)


def fuse_pointer_net_params(wp, bp, wh, bh, wt, bt):
    """One-time parameter prep (hoisted out of the per-forward path).

    Returns bf16 fused weight (H, 2*D + PAD), f32 fused bias (1, 2*D + PAD),
    plus (L, D). Linear weights are stored as (in, out): y = x @ W + b.
    """
    H, L = wp.shape
    D = wh.shape[1]
    assert wh.shape == (H, D) and wt.shape == (H, D)
    pad = max(128, ((L + 127) // 128) * 128)                # lane-dense pointer block
    wp_pad = jnp.zeros((H, pad), wp.dtype).at[:, :L].set(wp)
    bp_pad = jnp.zeros((1, pad), bp.dtype).at[:, :L].set(bp)
    w_fused = jnp.concatenate([wh, wt, wp_pad], axis=1).astype(jnp.bfloat16)
    b_fused = jnp.concatenate([bh, bt, bp_pad], axis=1).astype(jnp.float32)
    return w_fused, b_fused, L, D


def pointer_net_forward(embedding, w_fused, b_fused, label_num, d=D_CON):
    """embedding: (B, S, H) from the encoder. Returns (pointer, concurrence)."""
    B, S, H = embedding.shape
    Wtot = w_fused.shape[1]
    L = label_num

    # In production the encoder output is already bf16; casting here halves the
    # kernel's input DMA bytes (matmuls still accumulate in f32).
    emb2d = embedding.reshape(B * S, H).astype(jnp.bfloat16)

    kernel = functools.partial(pointer_net_kernel, d=d, l=L)

    cost = pl.CostEstimate(
        flops=2 * B * S * H * Wtot + 2 * B * S * S * d,
        transcendentals=B * S * L + B * S * S,               # sigmoids
        bytes_accessed=(B * S * H * 2 + H * Wtot * 2 + Wtot * 4
                        + B * S * L * 4 + B * S * S * 4),
    )

    pointer, concurrence = pl.pallas_call(
        kernel,
        out_shape=(
            jax.ShapeDtypeStruct((B, S, L), jnp.float32),
            jax.ShapeDtypeStruct((B, S, S), jnp.float32),
        ),
        grid_spec=pltpu.PrefetchScalarGridSpec(
            num_scalar_prefetch=0,
            grid=(B,),                                       # one step per batch element
            in_specs=[
                pl.BlockSpec((S, H), lambda b: (b, 0)),      # per-batch row tile
                pl.BlockSpec((H, Wtot), lambda b: (0, 0)),   # weights stay VMEM-resident
                pl.BlockSpec((1, Wtot), lambda b: (0, 0)),   # bias stays VMEM-resident
            ],
            out_specs=(
                pl.BlockSpec((1, S, L), lambda b: (b, 0, 0)),
                pl.BlockSpec((1, S, S), lambda b: (b, 0, 0)),
            ),
        ),
        compiler_params=pltpu.CompilerParams(
            dimension_semantics=("parallel",),               # both TCs on v7x
            vmem_limit_bytes=32 * 1024 * 1024,               # fits v5e/v6e/v7x scoped VMEM
        ),
        cost_estimate=cost,
    )(emb2d, w_fused, b_fused)

    return pointer, concurrence


def reference_forward(embedding, wp, bp, wh, bh, wt, bt):
    pointer = jax.nn.sigmoid(jnp.einsum("bsh,hl->bsl", embedding, wp) + bp[0])
    start = jnp.einsum("bsh,hd->bsd", embedding, wh) + bh[0]
    end = jnp.einsum("bsh,hd->bsd", embedding, wt) + bt[0]
    concurrence = jax.nn.sigmoid(jnp.einsum("bsd,btd->bst", start, end))
    return pointer, concurrence


if __name__ == "__main__":
    # Small shapes consistent with the module's forward.
    B, S, H = 2, 128, 128          # batch, seq, encoder hidden size
    L = 8                          # label_categories_num
    D = D_CON                      # hardcoded con_head/con_tail width

    key = jax.random.PRNGKey(0)
    k_emb, k_wp, k_bp, k_wh, k_bh, k_wt, k_bt = jax.random.split(key, 7)

    embedding = jax.random.normal(k_emb, (B, S, H), dtype=jnp.float32)
    # Deterministic synthetic parameters (shapes from the module's __init__).
    wp = jax.random.normal(k_wp, (H, L), dtype=jnp.float32) * 0.02
    bp = jax.random.normal(k_bp, (1, L), dtype=jnp.float32) * 0.02
    wh = jax.random.normal(k_wh, (H, D), dtype=jnp.float32) * 0.02
    bh = jax.random.normal(k_bh, (1, D), dtype=jnp.float32) * 0.02
    wt = jax.random.normal(k_wt, (H, D), dtype=jnp.float32) * 0.02
    bt = jax.random.normal(k_bt, (1, D), dtype=jnp.float32) * 0.02

    # One-time parameter fusion (parameter-load time, not per forward call).
    w_fused, b_fused, L_out, D_out = fuse_pointer_net_params(wp, bp, wh, bh, wt, bt)
    jax.block_until_ready((w_fused, b_fused))

    pointer, concurrence = pointer_net_forward(embedding, w_fused, b_fused, L_out, D_out)
    jax.block_until_ready((pointer, concurrence))

    ref_ptr, ref_con = reference_forward(embedding, wp, bp, wh, bh, wt, bt)
    assert pointer.shape == (B, S, L) and concurrence.shape == (B, S, S)
    # bf16 operands (f32 accumulation) vs the f32 reference: relaxed tolerance.
    assert jnp.allclose(pointer, ref_ptr, atol=2e-2, rtol=2e-2)
    assert jnp.allclose(concurrence, ref_con, atol=2e-2, rtol=2e-2)

    print("KERNEL_OK")
</pallas_src>

<mosaic_0001>
module attributes {stable_mosaic.version = 11 : i64} {
  func.func @pointer_net_kernel(%arg0: i32, %arg1: memref<128x128xbf16, #tpu.memory_space<vmem>>, %arg2: memref<128x640xbf16, #tpu.memory_space<vmem>>, %arg3: memref<1x640xf32, #tpu.memory_space<vmem>>, %arg4: memref<1x128x8xf32, #tpu.memory_space<vmem>>, %arg5: memref<1x128x128xf32, #tpu.memory_space<vmem>>) attributes {dimension_semantics = [#tpu.dimension_semantics<parallel>], iteration_bounds = array<i64: 2>, scalar_prefetch = 0 : i64, scratch_operands = 0 : i64, tpu.core_type = #tpu.core_type<tc>, window_params = [{transform_indices = @transform_0, window_bounds = array<i64: 128, 128>}, {pipeline_mode = #tpu.pipeline_mode<synchronous>, transform_indices = @transform_1, window_bounds = array<i64: 128, 640>}, {pipeline_mode = #tpu.pipeline_mode<synchronous>, transform_indices = @transform_2, window_bounds = array<i64: 1, 640>}, {transform_indices = @transform_3, window_bounds = array<i64: 1, 128, 8>}, {transform_indices = @transform_4, window_bounds = array<i64: 1, 128, 128>}]} {
    %c0 = arith.constant 0 : index
    %c0_0 = arith.constant 0 : index
    %0 = vector.load %arg1[%c0, %c0_0] : memref<128x128xbf16, #tpu.memory_space<vmem>>, vector<128x128xbf16>
    %c0_1 = arith.constant 0 : index
    %c0_2 = arith.constant 0 : index
    %1 = vector.load %arg2[%c0_1, %c0_2] : memref<128x640xbf16, #tpu.memory_space<vmem>>, vector<128x640xbf16>
    %cst = arith.constant dense<0.000000e+00> : vector<128x640xf32>
    %2 = tpu.matmul %0, %1, %cst {dimension_numbers = #tpu.dot_dimension_numbers<[1], [0], [0], [1], [0, 0, 1, 1], [], []>} : vector<128x128xbf16>, vector<128x640xbf16>, vector<128x640xf32> -> vector<128x640xf32>
    %c0_3 = arith.constant 0 : index
    %c0_4 = arith.constant 0 : index
    %3 = vector.load %arg3[%c0_3, %c0_4] : memref<1x640xf32, #tpu.memory_space<vmem>>, vector<1x640xf32>
    %4 = vector.broadcast %3 : vector<1x640xf32> to vector<128x640xf32>
    %5 = arith.addf %2, %4 : vector<128x640xf32>
    %6 = vector.extract_strided_slice %5 {offsets = [0, 0], sizes = [128, 256], strides = [1, 1]} : vector<128x640xf32> to vector<128x256xf32>
    %7 = vector.extract_strided_slice %5 {offsets = [0, 256], sizes = [128, 256], strides = [1, 1]} : vector<128x640xf32> to vector<128x256xf32>
    %8 = vector.extract_strided_slice %5 {offsets = [0, 512], sizes = [128, 8], strides = [1, 1]} : vector<128x640xf32> to vector<128x8xf32>
    %9 = arith.negf %8 : vector<128x8xf32>
    %10 = math.exp %9 : vector<128x8xf32>
    %cst_5 = arith.constant 1.000000e+00 : f32
    %11 = vector.broadcast %cst_5 : f32 to vector<128x8xf32>
    %12 = arith.addf %11, %10 : vector<128x8xf32>
    %13 = arith.divf %11, %12 : vector<128x8xf32>
    %c0_6 = arith.constant 0 : index
    %c0_7 = arith.constant 0 : index
    %c0_8 = arith.constant 0 : index
    %14 = vector.load %arg4[%c0_6, %c0_7, %c0_8] : memref<1x128x8xf32, #tpu.memory_space<vmem>>, vector<1x128x8xf32>
    %15 = vector.shape_cast %14 : vector<1x128x8xf32> to vector<128x8xf32>
    %16 = vector.shape_cast %13 : vector<128x8xf32> to vector<1x128x8xf32>
    tpu.vector_store %arg4[%c0_6, %c0_7, %c0_8], %16 {strides = array<i32>} : memref<1x128x8xf32, #tpu.memory_space<vmem>>, vector<1x128x8xf32>,
    %cst_9 = arith.constant dense<0.000000e+00> : vector<128x128xf32>
    %17 = tpu.matmul %6, %7, %cst_9 {dimension_numbers = #tpu.dot_dimension_numbers<[1], [1], [0], [0], [0, 0, 1, 0], [], []>} : vector<128x256xf32>, vector<128x256xf32>, vector<128x128xf32> -> vector<128x128xf32>
    %18 = arith.negf %17 : vector<128x128xf32>
    %19 = math.exp %18 : vector<128x128xf32>
    %cst_10 = arith.constant 1.000000e+00 : f32
    %20 = vector.broadcast %cst_10 : f32 to vector<128x128xf32>
    %21 = arith.addf %20, %19 : vector<128x128xf32>
    %22 = arith.divf %20, %21 : vector<128x128xf32>
    %c0_11 = arith.constant 0 : index
    %c0_12 = arith.constant 0 : index
    %c0_13 = arith.constant 0 : index
    %23 = vector.load %arg5[%c0_11, %c0_12, %c0_13] : memref<1x128x128xf32, #tpu.memory_space<vmem>>, vector<1x128x128xf32>
    %24 = vector.shape_cast %23 : vector<1x128x128xf32> to vector<128x128xf32>
    %25 = vector.shape_cast %22 : vector<128x128xf32> to vector<1x128x128xf32>
    tpu.vector_store %arg5[%c0_11, %c0_12, %c0_13], %25 {strides = array<i32>} : memref<1x128x128xf32, #tpu.memory_space<vmem>>, vector<1x128x128xf32>,
    return
  }
  func.func @transform_0(%arg0: i32) -> (i32, i32) {
    %c0_i32 = arith.constant 0 : i32
    %c0_i32_0 = arith.constant 0 : i32
    return %arg0, %c0_i32 : i32, i32
  }
  func.func @transform_1(%arg0: i32) -> (i32, i32) {
    %c0_i32 = arith.constant 0 : i32
    %c0_i32_0 = arith.constant 0 : i32
    %c0_i32_1 = arith.constant 0 : i32
    return %c0_i32, %c0_i32_0 : i32, i32
  }
  func.func @transform_2(%arg0: i32) -> (i32, i32) {
    %c0_i32 = arith.constant 0 : i32
    %c0_i32_0 = arith.constant 0 : i32
    %c0_i32_1 = arith.constant 0 : i32
    return %c0_i32, %c0_i32_0 : i32, i32
  }
  func.func @transform_3(%arg0: i32) -> (i32, i32, i32) {
    %c0_i32 = arith.constant 0 : i32
    %c0_i32_0 = arith.constant 0 : i32
    %c0_i32_1 = arith.constant 0 : i32
    return %arg0, %c0_i32, %c0_i32_0 : i32, i32, i32
  }
  func.func @transform_4(%arg0: i32) -> (i32, i32, i32) {
    %c0_i32 = arith.constant 0 : i32
    %c0_i32_0 = arith.constant 0 : i32
    %c0_i32_1 = arith.constant 0 : i32
    return %arg0, %c0_i32, %c0_i32_0 : i32, i32, i32
  }
}

</mosaic_0001>

<llo_original>
// kernel: tpu_custom_call.1
$region0: #{tpu_custom_call.1}
  #allocation0 [shape = 'u32[]', space=smem, size = 0x4, offset = 0x4, fixed_abs, tag = 'smem constant byte address 0x4 - core index']
  #allocation1 [shape = 'u32[144,128]{1,0:T(1,128)}', space=vmem, size = 0x12000, scoped, tag = 'internal scratch']
  %s0 = inlined_call_operand.hbm [shape: bf16[256,128], index: 0, kind: input, shape index: {}]
  %s1 = inlined_call_operand.hbm [shape: bf16[128,640], index: 1, kind: input, shape index: {}]
  %s2 = inlined_call_operand.hbm [shape: f32[1,640], index: 2, kind: input, shape index: {}]
  %s3 = inlined_call_operand.vmem [shape: f32[2,128,8], index: 3, kind: output, shape index: {0}]
  %s4 = inlined_call_operand.hbm [shape: f32[2,128,128], index: 4, kind: output, shape index: {1}]
  %5 = xla_tuple %s3, %s4
  %s6 = sld [smem:[#allocation0]]
  $region65: #{tpu_custom_call.1} parent=0
    _
  %s8 = ssub.s32 1, %s6
  %s9 = scalar_select 0, %s8, %s6
  $region1: #{tpu_custom_call.1} parent=0
    #allocation2 [shape = 'u8[65536]{0}', space=vmem, size = 0x10000, scoped, tag = 'input window, operand 0']
    #allocation3 [shape = 's32[2]{0}', space=sflag, size = 0x8, scoped, tag = 'scoped memory for tpu_custom_call.1']
    #allocation4 [shape = 's32[2]{0}', space=sflag, size = 0x8, scoped, tag = 'scoped memory for tpu_custom_call.1']
    #allocation5 [shape = 'u8[163840]{0}', space=vmem, size = 0x28000, scoped, tag = 'input window, operand 1, single buffered']
    #allocation6 [shape = 's32[1]{0}', space=sflag, size = 0x4, scoped, tag = 'scoped memory for tpu_custom_call.1']
    #allocation7 [shape = 'u8[2560]{0}', space=vmem, size = 0xc00, scoped, tag = 'input window, operand 2, single buffered']
    #allocation8 [shape = 'u8[131072]{0}', space=vmem, size = 0x20000, scoped, tag = 'output window, operand 1']
    %10 = vsyncpa [#allocation3], 0
    %s11 = scalar_lea.sflag [#allocation3], 1
    %12 = vsyncpa %s11, 0
    %13 = vsyncpa [#allocation6], 0
    %14 = vsyncpa [#allocation4], 0
    %s15 = scalar_lea.sflag [#allocation4], 1
    %16 = vsyncpa %s15, 0
    loop: start=0, step=1, limit=4
    $region2: #{tpu_custom_call.1} parent=1 // loop_pre_header
      _
    $region3: #{tpu_custom_call.1} parent=1 // loop_header
      %s18 = sphi 0, %s22
      %p19 = scmp.ge.s32.totalorder %s18, 4
      %s28 = sphi 0, %s30
      %s31 = sphi 0, %s28
      %s32 = sphi 0, %s31
      %s48 = sphi 0, %s32
      %s52 = sphi 0, %s52
      %s54 = sphi 0, %s52
      %s55 = sphi 0, %s54
      %s69 = sphi 0, %s55
      %s73 = sphi 0, %s73
      %s75 = sphi 0, %s73
      %s76 = sphi 0, %s75
      %s90 = sphi 0, %s76
      %s96 = sphi 0, %s98
      %s99 = sphi 0, %s96
      %s100 = sphi 0, %s99
      %s116 = sphi 0, %s100
      %s122 = sphi 0, %s124
      %s125 = sphi 0, %s122
      %s126 = sphi 0, %s125
      %s142 = sphi 0, %s126
    $region4: #{tpu_custom_call.1} parent=1 // loop_header_branch
      %21 = sbr.rel (%p19) target = $region8
    $region5: #{tpu_custom_call.1} parent=1 // loop_body
      %s23 = ssub.s32 %s18, 1
      %s24 = ssub.s32 %s18, 2
      %s25 = sadd.s32 %s18, 1
      %s26 = ssub.s32 %s18, %s25
      %p27 = scmp.eq.s32.totalorder %s26, 0
      %s29 = sadd.s32 %s28, 1
      %s30 = scalar_select %p27, %s28, %s29
      %p33 = pneg %p27
      %p34 = scmp.eq.s32.totalorder %s18, 1
      %p35 = por %p33, %p34
      %p36 = scmp.ne.s32.totalorder %s28, %s31
      %p37 = scmp.eq.s32.totalorder %s18, 0
      %p38 = por %p36, %p37
      %p39 = scmp.ne.s32.totalorder %s28, %s31
      %p40 = scmp.eq.s32.totalorder %s23, 1
      %p41 = por %p39, %p40
      %p42 = scmp.ne.s32.totalorder %s31, %s32
      %p43 = scmp.eq.s32.totalorder %s23, 0
      %p44 = por %p42, %p43
      %p45 = scmp.ne.s32.totalorder %s31, %s32
      %p46 = scmp.eq.s32.totalorder %s24, 1
      %p47 = por %p45, %p46
      %p49 = scmp.ne.s32.totalorder %s32, %s48
      %p50 = scmp.eq.s32.totalorder %s24, 0
      %p51 = por %p49, %p50
      %s53 = sadd.s32 %s52, 1
      %p56 = scmp.eq.s32.totalorder %s18, 1
      %p57 = scmp.ne.s32.totalorder %s52, %s54
      %p58 = scmp.eq.s32.totalorder %s18, 0
      %p59 = por %p57, %p58
      %p60 = scmp.ne.s32.totalorder %s52, %s54
      %p61 = scmp.eq.s32.totalorder %s23, 1
      %p62 = por %p60, %p61
      %p63 = scmp.ne.s32.totalorder %s54, %s55
      %p64 = scmp.eq.s32.totalorder %s23, 0
      %p65 = por %p63, %p64
      %p66 = scmp.ne.s32.totalorder %s54, %s55
      %p67 = scmp.eq.s32.totalorder %s24, 1
      %p68 = por %p66, %p67
      %p70 = scmp.ne.s32.totalorder %s55, %s69
      %p71 = scmp.eq.s32.totalorder %s24, 0
      %p72 = por %p70, %p71
      %s74 = sadd.s32 %s73, 1
      %p77 = scmp.eq.s32.totalorder %s18, 1
      %p78 = scmp.ne.s32.totalorder %s73, %s75
      %p79 = scmp.eq.s32.totalorder %s18, 0
      %p80 = por %p78, %p79
      %p81 = scmp.ne.s32.totalorder %s73, %s75
      %p82 = scmp.eq.s32.totalorder %s23, 1
      %p83 = por %p81, %p82
      %p84 = scmp.ne.s32.totalorder %s75, %s76
      %p85 = scmp.eq.s32.totalorder %s23, 0
      %p86 = por %p84, %p85
      %p87 = scmp.ne.s32.totalorder %s75, %s76
      %p88 = scmp.eq.s32.totalorder %s24, 1
      %p89 = por %p87, %p88
      %p91 = scmp.ne.s32.totalorder %s76, %s90
      %p92 = scmp.eq.s32.totalorder %s24, 0
      %p93 = por %p91, %p92
      %s94 = ssub.s32 %s18, %s25
      %p95 = scmp.eq.s32.totalorder %s94, 0
      %s97 = sadd.s32 %s96, 1
      %s98 = scalar_select %p95, %s96, %s97
      %p101 = pneg %p95
      %p102 = scmp.eq.s32.totalorder %s18, 1
      %p103 = por %p101, %p102
      %p104 = scmp.ne.s32.totalorder %s96, %s99
      %p105 = scmp.eq.s32.totalorder %s18, 0
      %p106 = por %p104, %p105
      %p107 = scmp.ne.s32.totalorder %s96, %s99
      %p108 = scmp.eq.s32.totalorder %s23, 1
      %p109 = por %p107, %p108
      %p110 = scmp.ne.s32.totalorder %s99, %s100
      %p111 = scmp.eq.s32.totalorder %s23, 0
      %p112 = por %p110, %p111
      %p113 = scmp.ne.s32.totalorder %s99, %s100
      %p114 = scmp.eq.s32.totalorder %s24, 1
      %p115 = por %p113, %p114
      %p117 = scmp.ne.s32.totalorder %s100, %s116
      %p118 = scmp.eq.s32.totalorder %s24, 0
      %p119 = por %p117, %p118
      %s120 = ssub.s32 %s18, %s25
      %p121 = scmp.eq.s32.totalorder %s120, 0
      %s123 = sadd.s32 %s122, 1
      %s124 = scalar_select %p121, %s122, %s123
      %p127 = pneg %p121
      %p128 = scmp.eq.s32.totalorder %s18, 1
      %p129 = por %p127, %p128
      %p130 = scmp.ne.s32.totalorder %s122, %s125
      %p131 = scmp.eq.s32.totalorder %s18, 0
      %p132 = por %p130, %p131
      %p133 = scmp.ne.s32.totalorder %s122, %s125
      %p134 = scmp.eq.s32.totalorder %s23, 1
      %p135 = por %p133, %p134
      %p136 = scmp.ne.s32.totalorder %s125, %s126
      %p137 = scmp.eq.s32.totalorder %s23, 0
      %p138 = por %p136, %p137
      %p139 = scmp.ne.s32.totalorder %s125, %s126
      %p140 = scmp.eq.s32.totalorder %s24, 1
      %p141 = por %p139, %p140
      %p143 = scmp.ne.s32.totalorder %s126, %s142
      %p144 = scmp.eq.s32.totalorder %s24, 0
      %p145 = por %p143, %p144
      %p146 = scmp.le.s32.totalorder 1, %s18
      %p147 = scmp.lt.s32.totalorder %s18, 3
      %p148 = pnand %p146, %p147
      %p149 = pneg %p148
      // Predicated region
      $region9: #{tpu_custom_call.1} parent=5 // pred_check
        _
      $region10: #{tpu_custom_call.1} parent=5 // pred_check_branch
        %151 = sbr.rel (%p148) target = $region12
      $region11: #{tpu_custom_call.1} parent=5 // pred_region
        %s152 = ssub.s32 %s18, 1
        // Predicated region
        $region13: #{tpu_custom_call.1} parent=11 // pred_check
          %p153 = pneg %p65
        $region14: #{tpu_custom_call.1} parent=11 // pred_check_branch
          %155 = sbr.rel (%p153) target = $region16
        $region15: #{tpu_custom_call.1} parent=11 // pred_region
          %s157 = ssub.s32 5120, 5120
          %158 = vsyncadd [#allocation6], %s157
          %s159 = sshll.u32 [#allocation5], 4
          %s160 = int_to_ptr.vmem [resolvable:$true] %s159
          %165 = dma.hbm_to_vmem [thread:$0]  %s1, 5120, %s160, [#allocation6], 320, 320, 20
        $region16: #{tpu_custom_call.1} parent=11 // pred_fallthru
          _
        // Predicated region
        $region17: #{tpu_custom_call.1} parent=11 // pred_check
          %p166 = pneg %p86
        $region18: #{tpu_custom_call.1} parent=11 // pred_check_branch
          %168 = sbr.rel (%p166) target = $region20
        $region19: #{tpu_custom_call.1} parent=11 // pred_region
          %s170 = ssub.s32 80, 80
          %171 = vsyncadd [#allocation6], %s170
          %s173 = sshll.u32 [#allocation7], 4
          %s174 = int_to_ptr.vmem [resolvable:$true] %s173
          %176 = dma.hbm_to_vmem [thread:$0]  %s2, 80, %s174, [#allocation6]
        $region20: #{tpu_custom_call.1} parent=11 // pred_fallthru
          _
      $region12: #{tpu_custom_call.1} parent=5 // pred_fallthru
        _
      %p177 = scmp.lt.s32.totalorder %s18, 2
      // Predicated region
      $region21: #{tpu_custom_call.1} parent=5 // pred_check
        %p178 = pneg %p177
      $region22: #{tpu_custom_call.1} parent=5 // pred_check_branch
        %180 = sbr.rel (%p178) target = $region24
      $region23: #{tpu_custom_call.1} parent=5 // pred_region
        // Predicated region
        $region25: #{tpu_custom_call.1} parent=23 // pred_check
          %p181 = pneg %p38
        $region26: #{tpu_custom_call.1} parent=23 // pred_check_branch
          %183 = sbr.rel (%p181) target = $region28
        $region27: #{tpu_custom_call.1} parent=23 // pred_region
          %s184 = sand.u32 %s28, 1
          %s185 = scalar_lea.sflag [#allocation3], %s184
          %s186 = sand.u32 %s28, 1
          %s187 = smul.addr %s186, 64
          %s188 = scalar_lea.vmem [#allocation2], %s187
          %s189 = smul.u32 16, %s18
          %s191 = ssub.s32 1024, 1024
          %192 = vsyncadd %s185, %s191
          %s193 = smul.addr %s189, 64
          %s194 = scalar_lea.hbm %s0, %s193
          %s195 = sshll.u32 %s188, 4
          %s196 = int_to_ptr.vmem [resolvable:$true] %s195
          %201 = dma.hbm_to_vmem [thread:$0]  %s194, 1024, %s196, %s185, 64, 64, 4
        $region28: #{tpu_custom_call.1} parent=23 // pred_fallthru
          _
      $region24: #{tpu_custom_call.1} parent=5 // pred_fallthru
        _
      %p202 = scmp.le.s32.totalorder 1, %s18
      %p203 = scmp.lt.s32.totalorder %s18, 3
      %p204 = pnand %p202, %p203
      %p205 = pneg %p204
      // Predicated region
      $region29: #{tpu_custom_call.1} parent=5 // pred_check
        _
      $region30: #{tpu_custom_call.1} parent=5 // pred_check_branch
        %207 = sbr.rel (%p204) target = $region32
      $region31: #{tpu_custom_call.1} parent=5 // pred_region
        %s208 = ssub.s32 %s18, 1
        %s209 = sand.u32 %s31, 1
        %s210 = scalar_lea.sflag [#allocation3], %s209
        %s211 = sand.u32 %s31, 1
        %s212 = smul.addr %s211, 64
        %s213 = scalar_lea.vmem [#allocation2], %s212
        // Predicated region
        $region33: #{tpu_custom_call.1} parent=31 // pred_check
          %p214 = pneg %p44
        $region34: #{tpu_custom_call.1} parent=31 // pred_check_branch
          %216 = sbr.rel (%p214) target = $region36
        $region35: #{tpu_custom_call.1} parent=31 // pred_region
          %217 = dma.done %s210, 1024
        $region36: #{tpu_custom_call.1} parent=31 // pred_fallthru
          _
        // Predicated region
        $region37: #{tpu_custom_call.1} parent=31 // pred_check
          %p218 = pneg %p65
        $region38: #{tpu_custom_call.1} parent=31 // pred_check_branch
          %220 = sbr.rel (%p218) target = $region40
        $region39: #{tpu_custom_call.1} parent=31 // pred_region
          %221 = dma.done [#allocation6], 5120
        $region40: #{tpu_custom_call.1} parent=31 // pred_fallthru
          _
        // Predicated region
        $region41: #{tpu_custom_call.1} parent=31 // pred_check
          %p222 = pneg %p86
        $region42: #{tpu_custom_call.1} parent=31 // pred_check_branch
          %224 = sbr.rel (%p222) target = $region44
        $region43: #{tpu_custom_call.1} parent=31 // pred_region
          %225 = dma.done [#allocation6], 80
        $region44: #{tpu_custom_call.1} parent=31 // pred_fallthru
          _
        %s226 = sand.u32 %s31, 1
        %s227 = scalar_lea.sflag [#allocation3], %s226
        %s228 = sand.u32 %s31, 1
        %s229 = smul.addr %s228, 64
        %s230 = scalar_lea.vmem [#allocation2], %s229
        %p231 = pneg %p44
        %p232 = pneg %p41
        %p233 = pneg %p65
        %p234 = pneg %p62
        %p235 = pneg %p86
        %p236 = pneg %p83
        %p237 = pneg %p112
        %p238 = pneg %p109
        %p239 = scmp.lt.s32.totalorder %s23, 1
        %s240 = scalar_select %p239, %s23, 1
        %s241 = smul.addr %s240, 16
        %s242 = smul.addr %s241, 8
        %s243 = scalar_lea.vmem %s3, %s242
        %p244 = pneg %p138
        %p245 = pneg %p135
        %s246 = sand.u32 %s125, 1
        %s247 = scalar_lea.sflag [#allocation4], %s246
        %s248 = sand.u32 %s125, 1
        %s249 = smul.addr %s248, 128
        %s250 = scalar_lea.vmem [#allocation8], %s249
        %s251 = smul.u32 16, %s23
        %p252 = scmp.lt.s32.totalorder %s23, 1
        %s253 = scalar_select %p252, %s23, 1
        %s254 = smul.addr %s253, 16
        %s255 = smul.addr %s254, 8
        %s256 = scalar_lea.vmem %s3, %s255
        %v258 = vld [vmem:[%s213] sm:$0xf]
        %v259 = vld [vmem:[%s213 + $0x4] sm:$0xf]
        %v260 = vld [vmem:[%s213 + $0x8] sm:$0xf]
        %v261 = vld [vmem:[%s213 + $0xc] sm:$0xf]
        %v262 = vld [vmem:[%s213 + $0x10] sm:$0xf]
        %v263 = vld [vmem:[%s213 + $0x14] sm:$0xf]
        %v264 = vld [vmem:[%s213 + $0x18] sm:$0xf]
        %v265 = vld [vmem:[%s213 + $0x1c] sm:$0xf]
        %v266 = vld [vmem:[%s213 + $0x20] sm:$0xf]
        %v267 = vld [vmem:[%s213 + $0x24] sm:$0xf]
        %v268 = vld [vmem:[%s213 + $0x28] sm:$0xf]
        %v269 = vld [vmem:[%s213 + $0x2c] sm:$0xf]
        %v270 = vld [vmem:[%s213 + $0x30] sm:$0xf]
        %v271 = vld [vmem:[%s213 + $0x34] sm:$0xf]
        %v272 = vld [vmem:[%s213 + $0x38] sm:$0xf]
        %v273 = vld [vmem:[%s213 + $0x3c] sm:$0xf]
        %v274 = vld [vmem:[#allocation5] sm:$0xff]
        %v275 = vld [vmem:[#allocation5 + $0x8] sm:$0xff]
        %v276 = vld [vmem:[#allocation5 + $0x10] sm:$0xf]
        %v277 = vld [vmem:[#allocation5 + $0x14] sm:$0xff]
        %v278 = vld [vmem:[#allocation5 + $0x1c] sm:$0xff]
        %v279 = vld [vmem:[#allocation5 + $0x24] sm:$0xf]
        %v280 = vld [vmem:[#allocation5 + $0x28] sm:$0xff]
        %v281 = vld [vmem:[#allocation5 + $0x30] sm:$0xff]
        %v282 = vld [vmem:[#allocation5 + $0x38] sm:$0xf]
        %v283 = vld [vmem:[#allocation5 + $0x3c] sm:$0xff]
        %v284 = vld [vmem:[#allocation5 + $0x44] sm:$0xff]
        %v285 = vld [vmem:[#allocation5 + $0x4c] sm:$0xf]
        %v286 = vld [vmem:[#allocation5 + $0x50] sm:$0xff]
        %v287 = vld [vmem:[#allocation5 + $0x58] sm:$0xff]
        %v288 = vld [vmem:[#allocation5 + $0x60] sm:$0xf]
        %v289 = vld [vmem:[#allocation5 + $0x64] sm:$0xff]
        %v290 = vld [vmem:[#allocation5 + $0x6c] sm:$0xff]
        %v291 = vld [vmem:[#allocation5 + $0x74] sm:$0xf]
        %v292 = vld [vmem:[#allocation5 + $0x78] sm:$0xff]
        %v293 = vld [vmem:[#allocation5 + $0x80] sm:$0xff]
        %v294 = vld [vmem:[#allocation5 + $0x88] sm:$0xf]
        %v295 = vld [vmem:[#allocation5 + $0x8c] sm:$0xff]
        %v296 = vld [vmem:[#allocation5 + $0x94] sm:$0xff]
        %v297 = vld [vmem:[#allocation5 + $0x9c] sm:$0xf]
        %v298 = vld [vmem:[#allocation5 + $0xa0] sm:$0xff]
        %v299 = vld [vmem:[#allocation5 + $0xa8] sm:$0xff]
        %v300 = vld [vmem:[#allocation5 + $0xb0] sm:$0xf]
        %v301 = vld [vmem:[#allocation5 + $0xb4] sm:$0xff]
        %v302 = vld [vmem:[#allocation5 + $0xbc] sm:$0xff]
        %v303 = vld [vmem:[#allocation5 + $0xc4] sm:$0xf]
        %v304 = vld [vmem:[#allocation5 + $0xc8] sm:$0xff]
        %v305 = vld [vmem:[#allocation5 + $0xd0] sm:$0xff]
        %v306 = vld [vmem:[#allocation5 + $0xd8] sm:$0xf]
        %v307 = vld [vmem:[#allocation5 + $0xdc] sm:$0xff]
        %v308 = vld [vmem:[#allocation5 + $0xe4] sm:$0xff]
        %v309 = vld [vmem:[#allocation5 + $0xec] sm:$0xf]
        %v310 = vld [vmem:[#allocation5 + $0xf0] sm:$0xff]
        %v311 = vld [vmem:[#allocation5 + $0xf8] sm:$0xff]
        %v312 = vld [vmem:[#allocation5 + $0x100] sm:$0xf]
        %v313 = vld [vmem:[#allocation5 + $0x104] sm:$0xff]
        %v314 = vld [vmem:[#allocation5 + $0x10c] sm:$0xff]
        %v315 = vld [vmem:[#allocation5 + $0x114] sm:$0xf]
        %v316 = vld [vmem:[#allocation5 + $0x118] sm:$0xff]
        %v317 = vld [vmem:[#allocation5 + $0x120] sm:$0xff]
        %v318 = vld [vmem:[#allocation5 + $0x128] sm:$0xf]
        %v319 = vld [vmem:[#allocation5 + $0x12c] sm:$0xff]
        %v320 = vld [vmem:[#allocation5 + $0x134] sm:$0xff]
        %v321 = vld [vmem:[#allocation5 + $0x13c] sm:$0xf]
        %v322 = vld [vmem:[#allocation7] sm:$0x1f]
        %v324 = vlaneseq
        %v325 = vshrl.u32 %v324, 7
        %v326 = vsub.s32 0, %v325
        %v327 = vrot.slane %v322, %v326
        %v328 = vlaneseq
        %v329 = vshrl.u32 %v328, 7
        %v330 = vsub.s32 1, %v329
        %v331 = vrot.slane %v322, %v330
        %v332 = vlaneseq
        %v333 = vshrl.u32 %v332, 7
        %v334 = vsub.s32 2, %v333
        %v335 = vrot.slane %v322, %v334
        %v336 = vlaneseq
        %v337 = vshrl.u32 %v336, 7
        %v338 = vsub.s32 3, %v337
        %v339 = vrot.slane %v322, %v338
        %v340 = vlaneseq
        %v341 = vshrl.u32 %v340, 7
        %v342 = vsub.s32 4, %v341
        %v343 = vrot.slane %v322, %v342
        %v365 = vunpack.c.l.b16 %v258
        %v366 = vunpack.c.l.b16 %v259
        %v367 = vunpack.c.l.b16 %v260
        %v368 = vunpack.c.l.b16 %v261
        %v369 = vunpack.c.l.b16 %v262
        %v370 = vunpack.c.l.b16 %v263
        %v371 = vunpack.c.l.b16 %v264
        %v372 = vunpack.c.l.b16 %v265
        %v373 = vunpack.c.l.b16 %v266
        %v374 = vunpack.c.l.b16 %v267
        %v375 = vunpack.c.l.b16 %v268
        %v376 = vunpack.c.l.b16 %v269
        %v377 = vunpack.c.l.b16 %v270
        %v378 = vunpack.c.l.b16 %v271
        %v379 = vunpack.c.l.b16 %v272
        %v380 = vunpack.c.l.b16 %v273
        %v381 = vpack.c.b16 %v366, %v365
        %v382 = vpack.c.b16 %v368, %v367
        %v383 = vpack.c.b16 %v370, %v369
        %v384 = vpack.c.b16 %v372, %v371
        %v385 = vpack.c.b16 %v374, %v373
        %v386 = vpack.c.b16 %v376, %v375
        %v387 = vpack.c.b16 %v378, %v377
        %v388 = vpack.c.b16 %v380, %v379
        %v445 = vunpack.c.l.b16 %v274
        %v446 = vunpack.c.h.b16 %v274
        %v447 = vunpack.c.l.b16 %v275
        %v448 = vunpack.c.h.b16 %v275
        %v449 = vunpack.c.l.b16 %v276
        %v450 = vunpack.c.l.b16 %v277
        %v451 = vunpack.c.h.b16 %v277
        %v452 = vunpack.c.l.b16 %v278
        %v453 = vunpack.c.h.b16 %v278
        %v454 = vunpack.c.l.b16 %v279
        %v455 = vunpack.c.l.b16 %v280
        %v456 = vunpack.c.h.b16 %v280
        %v457 = vunpack.c.l.b16 %v281
        %v458 = vunpack.c.h.b16 %v281
        %v459 = vunpack.c.l.b16 %v282
        %v460 = vunpack.c.l.b16 %v283
        %v461 = vunpack.c.h.b16 %v283
        %v462 = vunpack.c.l.b16 %v284
        %v463 = vunpack.c.h.b16 %v284
        %v464 = vunpack.c.l.b16 %v285
        %v465 = vunpack.c.l.b16 %v286
        %v466 = vunpack.c.h.b16 %v286
        %v467 = vunpack.c.l.b16 %v287
        %v468 = vunpack.c.h.b16 %v287
        %v469 = vunpack.c.l.b16 %v288
        %v470 = vunpack.c.l.b16 %v289
        %v471 = vunpack.c.h.b16 %v289
        %v472 = vunpack.c.l.b16 %v290
        %v473 = vunpack.c.h.b16 %v290
        %v474 = vunpack.c.l.b16 %v291
        %v475 = vunpack.c.l.b16 %v292
        %v476 = vunpack.c.h.b16 %v292
        %v477 = vunpack.c.l.b16 %v293
        %v478 = vunpack.c.h.b16 %v293
        %v479 = vunpack.c.l.b16 %v294
        %v480 = vunpack.c.l.b16 %v295
        %v481 = vunpack.c.h.b16 %v295
        %v482 = vunpack.c.l.b16 %v296
        %v483 = vunpack.c.h.b16 %v296
        %v484 = vunpack.c.l.b16 %v297
        %v485 = vunpack.c.l.b16 %v298
        %v486 = vunpack.c.h.b16 %v298
        %v487 = vunpack.c.l.b16 %v299
        %v488 = vunpack.c.h.b16 %v299
        %v489 = vunpack.c.l.b16 %v300
        %v490 = vunpack.c.l.b16 %v301
        %v491 = vunpack.c.h.b16 %v301
        %v492 = vunpack.c.l.b16 %v302
        %v493 = vunpack.c.h.b16 %v302
        %v494 = vunpack.c.l.b16 %v303
        %v495 = vunpack.c.l.b16 %v304
        %v496 = vunpack.c.h.b16 %v304
        %v497 = vunpack.c.l.b16 %v305
        %v498 = vunpack.c.h.b16 %v305
        %v499 = vunpack.c.l.b16 %v306
        %v500 = vunpack.c.l.b16 %v307
        %v501 = vunpack.c.h.b16 %v307
        %v502 = vunpack.c.l.b16 %v308
        %v503 = vunpack.c.h.b16 %v308
        %v504 = vunpack.c.l.b16 %v309
        %v505 = vunpack.c.l.b16 %v310
        %v506 = vunpack.c.h.b16 %v310
        %v507 = vunpack.c.l.b16 %v311
        %v508 = vunpack.c.h.b16 %v311
        %v509 = vunpack.c.l.b16 %v312
        %v510 = vunpack.c.l.b16 %v313
        %v511 = vunpack.c.h.b16 %v313
        %v512 = vunpack.c.l.b16 %v314
        %v513 = vunpack.c.h.b16 %v314
        %v514 = vunpack.c.l.b16 %v315
        %v515 = vunpack.c.l.b16 %v316
        %v516 = vunpack.c.h.b16 %v316
        %v517 = vunpack.c.l.b16 %v317
        %v518 = vunpack.c.h.b16 %v317
        %v519 = vunpack.c.l.b16 %v318
        %v520 = vunpack.c.l.b16 %v319
        %v521 = vunpack.c.h.b16 %v319
        %v522 = vunpack.c.l.b16 %v320
        %v523 = vunpack.c.h.b16 %v320
        %v524 = vunpack.c.l.b16 %v321
        %v525 = vpack.c.b16 %v450, %v445
        %v526 = vpack.c.b16 %v451, %v446
        %v527 = vpack.c.b16 %v452, %v447
        %v528 = vpack.c.b16 %v453, %v448
        %v529 = vpack.c.b16 %v454, %v449
        %v530 = vpack.c.b16 %v460, %v455
        %v531 = vpack.c.b16 %v461, %v456
        %v532 = vpack.c.b16 %v462, %v457
        %v533 = vpack.c.b16 %v463, %v458
        %v534 = vpack.c.b16 %v464, %v459
        %v535 = vpack.c.b16 %v470, %v465
        %v536 = vpack.c.b16 %v471, %v466
        %v537 = vpack.c.b16 %v472, %v467
        %v538 = vpack.c.b16 %v473, %v468
        %v539 = vpack.c.b16 %v474, %v469
        %v540 = vpack.c.b16 %v480, %v475
        %v541 = vpack.c.b16 %v481, %v476
        %v542 = vpack.c.b16 %v482, %v477
        %v543 = vpack.c.b16 %v483, %v478
        %v544 = vpack.c.b16 %v484, %v479
        %v545 = vpack.c.b16 %v490, %v485
        %v546 = vpack.c.b16 %v491, %v486
        %v547 = vpack.c.b16 %v492, %v487
        %v548 = vpack.c.b16 %v493, %v488
        %v549 = vpack.c.b16 %v494, %v489
        %v550 = vpack.c.b16 %v500, %v495
        %v551 = vpack.c.b16 %v501, %v496
        %v552 = vpack.c.b16 %v502, %v497
        %v553 = vpack.c.b16 %v503, %v498
        %v554 = vpack.c.b16 %v504, %v499
        %v555 = vpack.c.b16 %v510, %v505
        %v556 = vpack.c.b16 %v511, %v506
        %v557 = vpack.c.b16 %v512, %v507
        %v558 = vpack.c.b16 %v513, %v508
        %v559 = vpack.c.b16 %v514, %v509
        %v560 = vpack.c.b16 %v520, %v515
        %v561 = vpack.c.b16 %v521, %v516
        %v562 = vpack.c.b16 %v522, %v517
        %v563 = vpack.c.b16 %v523, %v518
        %v564 = vpack.c.b16 %v524, %v519
        %605 = vmatprep.subr.bf16.mxu0 %v561
        %606 = vmatpush1.bf16.msra.mxu0 %v560
        %607 = vmatprep.subr.bf16.mxu0 %v556
        %608 = vmatpush1.bf16.msra.mxu0 %v555
        %609 = vmatprep.subr.bf16.mxu0 %v551
        %610 = vmatpush1.bf16.msra.mxu0 %v550
        %611 = vmatprep.subr.bf16.mxu0 %v546
        %612 = vmatpush1.bf16.msra.mxu0 %v545
        %613 = vmatprep.subr.bf16.mxu0 %v541
        %614 = vmatpush1.bf16.msra.mxu0 %v540
        %615 = vmatprep.subr.bf16.mxu0 %v536
        %616 = vmatpush1.bf16.msra.mxu0 %v535
        %617 = vmatprep.subr.bf16.mxu0 %v531
        %618 = vmatpush1.bf16.msra.mxu0 %v530
        %619 = vmatprep.subr.bf16.mxu0 %v526
        %620 = vmatpush1.bf16.msra.mxu0 %v525
        %621 = vmatprep.subr.bf16.mxu0 0
        %622 = vmatpush2.bf16.msra.mxu0 0
        %623 = vmatprep.subr.bf16.mxu0 0
        %624 = vmatpush2.bf16.msra.mxu0 0
        %625 = vmatprep.subr.bf16.mxu0 0
        %626 = vmatpush2.bf16.msra.mxu0 0
        %627 = vmatprep.subr.bf16.mxu0 0
        %628 = vmatpush2.bf16.msra.mxu0 0
        %629 = vmatprep.subr.bf16.mxu0 0
        %630 = vmatpush2.bf16.msra.mxu0 0
        %631 = vmatprep.subr.bf16.mxu0 0
        %632 = vmatpush2.bf16.msra.mxu0 0
        %633 = vmatprep.subr.bf16.mxu0 0
        %634 = vmatpush2.bf16.msra.mxu0 0
        %635 = vmatprep.subr.bf16.mxu0 0
        %636 = vmatpush2.bf16.msra.mxu0 0
        %637 = vmatprep.mubr.bf16.mxu0 0
        %638 = vmatmul.mubr.bf16.gmra.mxu0 %v381
        %v639 = vpop.f32.mrf.mxu0
        %v640 = vadd.f32 %v327, %v639
        %v641 = vpop.f32.mrf.mxu0
        %v642 = vadd.f32 %v331, %v641
        %v643 = vpop.f32.mrf.mxu0
        %v644 = vadd.f32 %v327, %v643
        %v645 = vpop.f32.mrf.mxu0
        %v646 = vadd.f32 %v331, %v645
        %647 = vmatprep.mubr.bf16.mxu0 0
        %648 = vmatmul.mubr.bf16.gmra.mxu0 %v382
        %v649 = vpop.f32.mrf.mxu0
        %v650 = vadd.f32 %v327, %v649
        %v651 = vpop.f32.mrf.mxu0
        %v652 = vadd.f32 %v331, %v651
        %v653 = vpop.f32.mrf.mxu0
        %v654 = vadd.f32 %v327, %v653
        %v655 = vpop.f32.mrf.mxu0
        %v656 = vadd.f32 %v331, %v655
        %657 = vmatprep.mubr.bf16.mxu0 0
        %658 = vmatmul.mubr.bf16.gmra.mxu0 %v383
        %v659 = vpop.f32.mrf.mxu0
        %v660 = vadd.f32 %v327, %v659
        %v661 = vpop.f32.mrf.mxu0
        %v662 = vadd.f32 %v331, %v661
        %v663 = vpop.f32.mrf.mxu0
        %v664 = vadd.f32 %v327, %v663
        %v665 = vpop.f32.mrf.mxu0
        %v666 = vadd.f32 %v331, %v665
        %667 = vmatprep.mubr.bf16.mxu0 0
        %668 = vmatmul.mubr.bf16.gmra.mxu0 %v384
        %v669 = vpop.f32.mrf.mxu0
        %v670 = vadd.f32 %v327, %v669
        %v671 = vpop.f32.mrf.mxu0
        %v672 = vadd.f32 %v331, %v671
        %v673 = vpop.f32.mrf.mxu0
        %v674 = vadd.f32 %v327, %v673
        %v675 = vpop.f32.mrf.mxu0
        %v676 = vadd.f32 %v331, %v675
        %677 = vmatprep.mubr.bf16.mxu0 0
        %678 = vmatmul.mubr.bf16.gmra.mxu0 %v385
        %v679 = vpop.f32.mrf.mxu0
        %v680 = vadd.f32 %v327, %v679
        %v681 = vpop.f32.mrf.mxu0
        %v682 = vadd.f32 %v331, %v681
        %v683 = vpop.f32.mrf.mxu0
        %v684 = vadd.f32 %v327, %v683
        %v685 = vpop.f32.mrf.mxu0
        %v686 = vadd.f32 %v331, %v685
        %687 = vmatprep.mubr.bf16.mxu0 0
        %688 = vmatmul.mubr.bf16.gmra.mxu0 %v386
        %v689 = vpop.f32.mrf.mxu0
        %v690 = vadd.f32 %v327, %v689
        %v691 = vpop.f32.mrf.mxu0
        %v692 = vadd.f32 %v331, %v691
        %v693 = vpop.f32.mrf.mxu0
        %v694 = vadd.f32 %v327, %v693
        %v695 = vpop.f32.mrf.mxu0
        %v696 = vadd.f32 %v331, %v695
        %697 = vmatprep.mubr.bf16.mxu0 0
        %698 = vmatmul.mubr.bf16.gmra.mxu0 %v387
        %v699 = vpop.f32.mrf.mxu0
        %v700 = vadd.f32 %v327, %v699
        %v701 = vpop.f32.mrf.mxu0
        %v702 = vadd.f32 %v331, %v701
        %v703 = vpop.f32.mrf.mxu0
        %v704 = vadd.f32 %v327, %v703
        %v705 = vpop.f32.mrf.mxu0
        %v706 = vadd.f32 %v331, %v705
        %707 = vmatprep.mubr.bf16.mxu0 0
        %708 = vmatmul.mubr.bf16.gmra.mxu0 %v388
        %v709 = vpop.f32.mrf.mxu0
        %v710 = vadd.f32 %v327, %v709
        %v711 = vpop.f32.mrf.mxu0
        %v712 = vadd.f32 %v331, %v711
        %v713 = vpop.f32.mrf.mxu0
        %v714 = vadd.f32 %v327, %v713
        %v715 = vpop.f32.mrf.mxu0
        %v716 = vadd.f32 %v331, %v715
        %717 = vdwg.mxu0
        %718 = vmatprep.subr.bf16.mxu0 %v563
        %719 = vmatpush1.bf16.msra.mxu0 %v562
        %720 = vmatprep.subr.bf16.mxu0 %v558
        %721 = vmatpush1.bf16.msra.mxu0 %v557
        %722 = vmatprep.subr.bf16.mxu0 %v553
        %723 = vmatpush1.bf16.msra.mxu0 %v552
        %724 = vmatprep.subr.bf16.mxu0 %v548
        %725 = vmatpush1.bf16.msra.mxu0 %v547
        %726 = vmatprep.subr.bf16.mxu0 %v543
        %727 = vmatpush1.bf16.msra.mxu0 %v542
        %728 = vmatprep.subr.bf16.mxu0 %v538
        %729 = vmatpush1.bf16.msra.mxu0 %v537
        %730 = vmatprep.subr.bf16.mxu0 %v533
        %731 = vmatpush1.bf16.msra.mxu0 %v532
        %732 = vmatprep.subr.bf16.mxu0 %v528
        %733 = vmatpush1.bf16.msra.mxu0 %v527
        %734 = vmatprep.subr.bf16.mxu0 0
        %735 = vmatpush2.bf16.msra.mxu0 0
        %736 = vmatprep.subr.bf16.mxu0 0
        %737 = vmatpush2.bf16.msra.mxu0 0
        %738 = vmatprep.subr.bf16.mxu0 0
        %739 = vmatpush2.bf16.msra.mxu0 0
        %740 = vmatprep.subr.bf16.mxu0 0
        %741 = vmatpush2.bf16.msra.mxu0 0
        %742 = vmatprep.subr.bf16.mxu0 0
        %743 = vmatpush2.bf16.msra.mxu0 0
        %744 = vmatprep.subr.bf16.mxu0 0
        %745 = vmatpush2.bf16.msra.mxu0 0
        %746 = vmatprep.subr.bf16.mxu0 0
        %747 = vmatpush2.bf16.msra.mxu0 0
        %748 = vmatprep.subr.bf16.mxu0 0
        %749 = vmatpush2.bf16.msra.mxu0 0
        %750 = vmatprep.mubr.bf16.mxu0 0
        %751 = vmatmul.mubr.bf16.gmra.mxu0 %v381
        %v752 = vpop.f32.mrf.mxu0
        %v753 = vadd.f32 %v335, %v752
        %v754 = vpop.f32.mrf.mxu0
        %v755 = vadd.f32 %v339, %v754
        %v756 = vpop.f32.mrf.mxu0
        %v757 = vadd.f32 %v335, %v756
        %v758 = vpop.f32.mrf.mxu0
        %v759 = vadd.f32 %v339, %v758
        %760 = vmatprep.mubr.bf16.mxu0 0
        %761 = vmatmul.mubr.bf16.gmra.mxu0 %v382
        %v762 = vpop.f32.mrf.mxu0
        %v763 = vadd.f32 %v335, %v762
        %v764 = vpop.f32.mrf.mxu0
        %v765 = vadd.f32 %v339, %v764
        %v766 = vpop.f32.mrf.mxu0
        %v767 = vadd.f32 %v335, %v766
        %v768 = vpop.f32.mrf.mxu0
        %v769 = vadd.f32 %v339, %v768
        %770 = vmatprep.mubr.bf16.mxu0 0
        %771 = vmatmul.mubr.bf16.gmra.mxu0 %v383
        %v772 = vpop.f32.mrf.mxu0
        %v773 = vadd.f32 %v335, %v772
        %v774 = vpop.f32.mrf.mxu0
        %v775 = vadd.f32 %v339, %v774
        %v776 = vpop.f32.mrf.mxu0
        %v777 = vadd.f32 %v335, %v776
        %v778 = vpop.f32.mrf.mxu0
        %v779 = vadd.f32 %v339, %v778
        %780 = vmatprep.mubr.bf16.mxu0 0
        %781 = vmatmul.mubr.bf16.gmra.mxu0 %v384
        %v782 = vpop.f32.mrf.mxu0
        %v783 = vadd.f32 %v335, %v782
        %v784 = vpop.f32.mrf.mxu0
        %v785 = vadd.f32 %v339, %v784
        %v786 = vpop.f32.mrf.mxu0
        %v787 = vadd.f32 %v335, %v786
        %v788 = vpop.f32.mrf.mxu0
        %v789 = vadd.f32 %v339, %v788
        %790 = vmatprep.mubr.bf16.mxu0 0
        %791 = vmatmul.mubr.bf16.gmra.mxu0 %v385
        %v792 = vpop.f32.mrf.mxu0
        %v793 = vadd.f32 %v335, %v792
        %v794 = vpop.f32.mrf.mxu0
        %v795 = vadd.f32 %v339, %v794
        %v796 = vpop.f32.mrf.mxu0
        %v797 = vadd.f32 %v335, %v796
        %v798 = vpop.f32.mrf.mxu0
        %v799 = vadd.f32 %v339, %v798
        %800 = vmatprep.mubr.bf16.mxu0 0
        %801 = vmatmul.mubr.bf16.gmra.mxu0 %v386
        %v802 = vpop.f32.mrf.mxu0
        %v803 = vadd.f32 %v335, %v802
        %v804 = vpop.f32.mrf.mxu0
        %v805 = vadd.f32 %v339, %v804
        %v806 = vpop.f32.mrf.mxu0
        %v807 = vadd.f32 %v335, %v806
        %v808 = vpop.f32.mrf.mxu0
        %v809 = vadd.f32 %v339, %v808
        %810 = vmatprep.mubr.bf16.mxu0 0
        %811 = vmatmul.mubr.bf16.gmra.mxu0 %v387
        %v812 = vpop.f32.mrf.mxu0
        %v813 = vadd.f32 %v335, %v812
        %v814 = vpop.f32.mrf.mxu0
        %v815 = vadd.f32 %v339, %v814
        %v816 = vpop.f32.mrf.mxu0
        %v817 = vadd.f32 %v335, %v816
        %v818 = vpop.f32.mrf.mxu0
        %v819 = vadd.f32 %v339, %v818
        %820 = vmatprep.mubr.bf16.mxu0 0
        %821 = vmatmul.mubr.bf16.gmra.mxu0 %v388
        %v822 = vpop.f32.mrf.mxu0
        %v823 = vadd.f32 %v335, %v822
        %v824 = vpop.f32.mrf.mxu0
        %v825 = vadd.f32 %v339, %v824
        %v826 = vpop.f32.mrf.mxu0
        %v827 = vadd.f32 %v335, %v826
        %v828 = vpop.f32.mrf.mxu0
        %v829 = vadd.f32 %v339, %v828
        %830 = vdwg.mxu0
        %831 = vmatprep.subr.bf16.mxu0 0
        %832 = vmatpush1.bf16.msra.mxu0 %v564
        %833 = vmatprep.subr.bf16.mxu0 0
        %834 = vmatpush1.bf16.msra.mxu0 %v559
        %835 = vmatprep.subr.bf16.mxu0 0
        %836 = vmatpush1.bf16.msra.mxu0 %v554
        %837 = vmatprep.subr.bf16.mxu0 0
        %838 = vmatpush1.bf16.msra.mxu0 %v549
        %839 = vmatprep.subr.bf16.mxu0 0
        %840 = vmatpush1.bf16.msra.mxu0 %v544
        %841 = vmatprep.subr.bf16.mxu0 0
        %842 = vmatpush1.bf16.msra.mxu0 %v539
        %843 = vmatprep.subr.bf16.mxu0 0
        %844 = vmatpush1.bf16.msra.mxu0 %v534
        %845 = vmatprep.subr.bf16.mxu0 0
        %846 = vmatpush1.bf16.msra.mxu0 %v529
        %847 = vmatprep.subr.bf16.mxu0 0
        %848 = vmatpush2.bf16.msra.mxu0 0
        %849 = vmatprep.subr.bf16.mxu0 0
        %850 = vmatpush2.bf16.msra.mxu0 0
        %851 = vmatprep.subr.bf16.mxu0 0
        %852 = vmatpush2.bf16.msra.mxu0 0
        %853 = vmatprep.subr.bf16.mxu0 0
        %854 = vmatpush2.bf16.msra.mxu0 0
        %855 = vmatprep.subr.bf16.mxu0 0
        %856 = vmatpush2.bf16.msra.mxu0 0
        %857 = vmatprep.subr.bf16.mxu0 0
        %858 = vmatpush2.bf16.msra.mxu0 0
        %859 = vmatprep.subr.bf16.mxu0 0
        %860 = vmatpush2.bf16.msra.mxu0 0
        %861 = vmatprep.subr.bf16.mxu0 0
        %862 = vmatpush2.bf16.msra.mxu0 0
        %863 = vmatprep.mubr.bf16.mxu0 0
        %864 = vmatmul.mubr.bf16.gmra.mxu0 %v381
        %v865 = vpop.f32.mrf.mxu0
        %v866 = vadd.f32 %v343, %v865
        %v867 = vpop.f32.mrf.mxu0
        %v868 = vpop.f32.mrf.mxu0
        %v869 = vadd.f32 %v343, %v868
        %v870 = vpop.f32.mrf.mxu0
        %871 = vmatprep.mubr.bf16.mxu0 0
        %872 = vmatmul.mubr.bf16.gmra.mxu0 %v382
        %v873 = vpop.f32.mrf.mxu0
        %v874 = vadd.f32 %v343, %v873
        %v875 = vpop.f32.mrf.mxu0
        %v876 = vpop.f32.mrf.mxu0
        %v877 = vadd.f32 %v343, %v876
        %v878 = vpop.f32.mrf.mxu0
        %879 = vmatprep.mubr.bf16.mxu0 0
        %880 = vmatmul.mubr.bf16.gmra.mxu0 %v383
        %v881 = vpop.f32.mrf.mxu0
        %v882 = vadd.f32 %v343, %v881
        %v883 = vpop.f32.mrf.mxu0
        %v884 = vpop.f32.mrf.mxu0
        %v885 = vadd.f32 %v343, %v884
        %v886 = vpop.f32.mrf.mxu0
        %887 = vmatprep.mubr.bf16.mxu0 0
        %888 = vmatmul.mubr.bf16.gmra.mxu0 %v384
        %v889 = vpop.f32.mrf.mxu0
        %v890 = vadd.f32 %v343, %v889
        %v891 = vpop.f32.mrf.mxu0
        %v892 = vpop.f32.mrf.mxu0
        %v893 = vadd.f32 %v343, %v892
        %v894 = vpop.f32.mrf.mxu0
        %895 = vmatprep.mubr.bf16.mxu0 0
        %896 = vmatmul.mubr.bf16.gmra.mxu0 %v385
        %v897 = vpop.f32.mrf.mxu0
        %v898 = vadd.f32 %v343, %v897
        %v899 = vpop.f32.mrf.mxu0
        %v900 = vpop.f32.mrf.mxu0
        %v901 = vadd.f32 %v343, %v900
        %v902 = vpop.f32.mrf.mxu0
        %903 = vmatprep.mubr.bf16.mxu0 0
        %904 = vmatmul.mubr.bf16.gmra.mxu0 %v386
        %v905 = vpop.f32.mrf.mxu0
        %v906 = vadd.f32 %v343, %v905
        %v907 = vpop.f32.mrf.mxu0
        %v908 = vpop.f32.mrf.mxu0
        %v909 = vadd.f32 %v343, %v908
        %v910 = vpop.f32.mrf.mxu0
        %911 = vmatprep.mubr.bf16.mxu0 0
        %912 = vmatmul.mubr.bf16.gmra.mxu0 %v387
        %v913 = vpop.f32.mrf.mxu0
        %v914 = vadd.f32 %v343, %v913
        %v915 = vpop.f32.mrf.mxu0
        %v916 = vpop.f32.mrf.mxu0
        %v917 = vadd.f32 %v343, %v916
        %v918 = vpop.f32.mrf.mxu0
        %919 = vmatprep.mubr.bf16.mxu0 0
        %920 = vmatmul.mubr.bf16.gmra.mxu0 %v388
        %v921 = vpop.f32.mrf.mxu0
        %v922 = vadd.f32 %v343, %v921
        %v923 = vpop.f32.mrf.mxu0
        %v924 = vpop.f32.mrf.mxu0
        %v925 = vadd.f32 %v343, %v924
        %v926 = vpop.f32.mrf.mxu0
        %927 = vdwg.mxu0
        %v928 = vxor.u32 %v866, 2147483648
        %v929 = vxor.u32 %v869, 2147483648
        %v930 = vxor.u32 %v874, 2147483648
        %v931 = vxor.u32 %v877, 2147483648
        %v932 = vxor.u32 %v882, 2147483648
        %v933 = vxor.u32 %v885, 2147483648
        %v934 = vxor.u32 %v890, 2147483648
        %v935 = vxor.u32 %v893, 2147483648
        %v936 = vxor.u32 %v898, 2147483648
        %v937 = vxor.u32 %v901, 2147483648
        %v938 = vxor.u32 %v906, 2147483648
        %v939 = vxor.u32 %v909, 2147483648
        %v940 = vxor.u32 %v914, 2147483648
        %v941 = vxor.u32 %v917, 2147483648
        %v942 = vxor.u32 %v922, 2147483648
        %v943 = vxor.u32 %v925, 2147483648
        %v944 = vmul.f32 %v928, 1.442695
        %v945 = vpow.pop %v944
        %v946 = vmul.f32 %v929, 1.442695
        %v947 = vpow.pop %v946
        %v948 = vmul.f32 %v930, 1.442695
        %v949 = vpow.pop %v948
        %v950 = vmul.f32 %v931, 1.442695
        %v951 = vpow.pop %v950
        %v952 = vmul.f32 %v932, 1.442695
        %v953 = vpow.pop %v952
        %v954 = vmul.f32 %v933, 1.442695
        %v955 = vpow.pop %v954
        %v956 = vmul.f32 %v934, 1.442695
        %v957 = vpow.pop %v956
        %v958 = vmul.f32 %v935, 1.442695
        %v959 = vpow.pop %v958
        %v960 = vmul.f32 %v936, 1.442695
        %v961 = vpow.pop %v960
        %v962 = vmul.f32 %v937, 1.442695
        %v963 = vpow.pop %v962
        %v964 = vmul.f32 %v938, 1.442695
        %v965 = vpow.pop %v964
        %v966 = vmul.f32 %v939, 1.442695
        %v967 = vpow.pop %v966
        %v968 = vmul.f32 %v940, 1.442695
        %v969 = vpow.pop %v968
        %v970 = vmul.f32 %v941, 1.442695
        %v971 = vpow.pop %v970
        %v972 = vmul.f32 %v942, 1.442695
        %v973 = vpow.pop %v972
        %v974 = vmul.f32 %v943, 1.442695
        %v975 = vpow.pop %v974
        %v976 = vadd.f32 %v945, 1.0
        %v977 = vadd.f32 %v947, 1.0
        %v978 = vadd.f32 %v949, 1.0
        %v979 = vadd.f32 %v951, 1.0
        %v980 = vadd.f32 %v953, 1.0
        %v981 = vadd.f32 %v955, 1.0
        %v982 = vadd.f32 %v957, 1.0
        %v983 = vadd.f32 %v959, 1.0
        %v984 = vadd.f32 %v961, 1.0
        %v985 = vadd.f32 %v963, 1.0
        %v986 = vadd.f32 %v965, 1.0
        %v987 = vadd.f32 %v967, 1.0
        %v988 = vadd.f32 %v969, 1.0
        %v989 = vadd.f32 %v971, 1.0
        %v990 = vadd.f32 %v973, 1.0
        %v991 = vadd.f32 %v975, 1.0
        %v992 = vrcp.pop %v976
        %v993 = vmul.f32 1.0, %v992
        %v994 = vrcp.pop %v977
        %v995 = vmul.f32 1.0, %v994
        %v996 = vrcp.pop %v978
        %v997 = vmul.f32 1.0, %v996
        %v998 = vrcp.pop %v979
        %v999 = vmul.f32 1.0, %v998
        %v1000 = vrcp.pop %v980
        %v1001 = vmul.f32 1.0, %v1000
        %v1002 = vrcp.pop %v981
        %v1003 = vmul.f32 1.0, %v1002
        %v1004 = vrcp.pop %v982
        %v1005 = vmul.f32 1.0, %v1004
        %v1006 = vrcp.pop %v983
        %v1007 = vmul.f32 1.0, %v1006
        %v1008 = vrcp.pop %v984
        %v1009 = vmul.f32 1.0, %v1008
        %v1010 = vrcp.pop %v985
        %v1011 = vmul.f32 1.0, %v1010
        %v1012 = vrcp.pop %v986
        %v1013 = vmul.f32 1.0, %v1012
        %v1014 = vrcp.pop %v987
        %v1015 = vmul.f32 1.0, %v1014
        %v1016 = vrcp.pop %v988
        %v1017 = vmul.f32 1.0, %v1016
        %v1018 = vrcp.pop %v989
        %v1019 = vmul.f32 1.0, %v1018
        %v1020 = vrcp.pop %v990
        %v1021 = vmul.f32 1.0, %v1020
        %v1022 = vrcp.pop %v991
        %v1023 = vmul.f32 1.0, %v1022
        %vm1024 = vcmask 64512
        %1025 = vst.msk [vmem:[%s256] sm:$0xff] %vm1024, %v993
        %1026 = vst.msk [vmem:[%s256 + $0x8] sm:$0xff] %vm1024, %v995
        %1027 = vst.msk [vmem:[%s256 + $0x10] sm:$0xff] %vm1024, %v997
        %1028 = vst.msk [vmem:[%s256 + $0x18] sm:$0xff] %vm1024, %v999
        %1029 = vst.msk [vmem:[%s256 + $0x20] sm:$0xff] %vm1024, %v1001
        %1030 = vst.msk [vmem:[%s256 + $0x28] sm:$0xff] %vm1024, %v1003
        %1031 = vst.msk [vmem:[%s256 + $0x30] sm:$0xff] %vm1024, %v1005
        %1032 = vst.msk [vmem:[%s256 + $0x38] sm:$0xff] %vm1024, %v1007
        %1033 = vst.msk [vmem:[%s256 + $0x40] sm:$0xff] %vm1024, %v1009
        %1034 = vst.msk [vmem:[%s256 + $0x48] sm:$0xff] %vm1024, %v1011
        %1035 = vst.msk [vmem:[%s256 + $0x50] sm:$0xff] %vm1024, %v1013
        %1036 = vst.msk [vmem:[%s256 + $0x58] sm:$0xff] %vm1024, %v1015
        %1037 = vst.msk [vmem:[%s256 + $0x60] sm:$0xff] %vm1024, %v1017
        %1038 = vst.msk [vmem:[%s256 + $0x68] sm:$0xff] %vm1024, %v1019
        %1039 = vst.msk [vmem:[%s256 + $0x70] sm:$0xff] %vm1024, %v1021
        %1040 = vst.msk [vmem:[%s256 + $0x78] sm:$0xff] %vm1024, %v1023
        %1041 = vmatprep.subr.mxu0 %v829
        %1042 = vmatpush1.xpose.msra.mxu0 %v827
        %1043 = vmatprep.subr.mxu0 %v825
        %1044 = vmatpush1.xpose.msra.mxu0 %v823
        %1045 = vmatprep.subr.mxu0 %v819
        %1046 = vmatpush1.xpose.msra.mxu0 %v817
        %1047 = vmatprep.subr.mxu0 %v815
        %1048 = vmatpush1.xpose.msra.mxu0 %v813
        %1049 = vmatprep.subr.mxu0 %v809
        %1050 = vmatpush1.xpose.msra.mxu0 %v807
        %1051 = vmatprep.subr.mxu0 %v805
        %1052 = vmatpush1.xpose.msra.mxu0 %v803
        %1053 = vmatprep.subr.mxu0 %v799
        %1054 = vmatpush1.xpose.msra.mxu0 %v797
        %1055 = vmatprep.subr.mxu0 %v795
        %1056 = vmatpush1.xpose.msra.mxu0 %v793
        %1057 = vmatprep.subr.mxu0 %v789
        %1058 = vmatpush1.xpose.msra.mxu0 %v787
        %1059 = vmatprep.subr.mxu0 %v785
        %1060 = vmatpush1.xpose.msra.mxu0 %v783
        %1061 = vmatprep.subr.mxu0 %v779
        %1062 = vmatpush1.xpose.msra.mxu0 %v777
        %1063 = vmatprep.subr.mxu0 %v775
        %1064 = vmatpush1.xpose.msra.mxu0 %v773
        %1065 = vmatprep.subr.mxu0 %v769
        %1066 = vmatpush1.xpose.msra.mxu0 %v767
        %1067 = vmatprep.subr.mxu0 %v765
        %1068 = vmatpush1.xpose.msra.mxu0 %v763
        %1069 = vmatprep.subr.mxu0 %v759
        %1070 = vmatpush1.xpose.msra.mxu0 %v757
        %1071 = vmatprep.subr.mxu0 %v755
        %1072 = vmatpush1.xpose.msra.mxu0 %v753
        %1073 = vmatprep.subr.mxu0 0.0
        %1074 = vmatpush2.xpose.msra.mxu0 0.0
        %1075 = vmatprep.subr.mxu0 0.0
        %1076 = vmatpush2.xpose.msra.mxu0 0.0
        %1077 = vmatprep.subr.mxu0 0.0
        %1078 = vmatpush2.xpose.msra.mxu0 0.0
        %1079 = vmatprep.subr.mxu0 0.0
        %1080 = vmatpush2.xpose.msra.mxu0 0.0
        %1081 = vmatprep.subr.mxu0 0.0
        %1082 = vmatpush2.xpose.msra.mxu0 0.0
        %1083 = vmatprep.subr.mxu0 0.0
        %1084 = vmatpush2.xpose.msra.mxu0 0.0
        %1085 = vmatprep.subr.mxu0 0.0
        %1086 = vmatpush2.xpose.msra.mxu0 0.0
        %1087 = vmatprep.subr.mxu0 0.0
        %1088 = vmatpush2.xpose.msra.mxu0 0.0
        %1089 = vmatprep.subr.mxu0 0.0
        %1090 = vmatpush2.xpose.msra.mxu0 0.0
        %1091 = vmatprep.subr.mxu0 0.0
        %1092 = vmatpush2.xpose.msra.mxu0 0.0
        %1093 = vmatprep.subr.mxu0 0.0
        %1094 = vmatpush2.xpose.msra.mxu0 0.0
        %1095 = vmatprep.subr.mxu0 0.0
        %1096 = vmatpush2.xpose.msra.mxu0 0.0
        %1097 = vmatprep.subr.mxu0 0.0
        %1098 = vmatpush2.xpose.msra.mxu0 0.0
        %1099 = vmatprep.subr.mxu0 0.0
        %1100 = vmatpush2.xpose.msra.mxu0 0.0
        %1101 = vmatprep.subr.mxu0 0.0
        %1102 = vmatpush2.xpose.msra.mxu0 0.0
        %1103 = vmatprep.subr.mxu0 0.0
        %1104 = vmatpush2.xpose.msra.mxu0 0.0
        %1105 = vmatprep.mubr.f32.mxu0 %v642
        %1106 = vmatmul.mubr.f32.gmra.mxu0 %v640
        %v1107 = vpop.f32.mrf.mxu0
        %v1108 = vadd.f32 0.0, %v1107
        %v1109 = vpop.f32.mrf.mxu0
        %1110 = vmatprep.mubr.f32.mxu0 %v646
        %1111 = vmatmul.mubr.f32.gmra.mxu0 %v644
        %v1112 = vpop.f32.mrf.mxu0
        %v1113 = vadd.f32 0.0, %v1112
        %v1114 = vpop.f32.mrf.mxu0
        %1115 = vmatprep.mubr.f32.mxu0 %v652
        %1116 = vmatmul.mubr.f32.gmra.mxu0 %v650
        %v1117 = vpop.f32.mrf.mxu0
        %v1118 = vadd.f32 0.0, %v1117
        %v1119 = vpop.f32.mrf.mxu0
        %1120 = vmatprep.mubr.f32.mxu0 %v656
        %1121 = vmatmul.mubr.f32.gmra.mxu0 %v654
        %v1122 = vpop.f32.mrf.mxu0
        %v1123 = vadd.f32 0.0, %v1122
        %v1124 = vpop.f32.mrf.mxu0
        %1125 = vmatprep.mubr.f32.mxu0 %v662
        %1126 = vmatmul.mubr.f32.gmra.mxu0 %v660
        %v1127 = vpop.f32.mrf.mxu0
        %v1128 = vadd.f32 0.0, %v1127
        %v1129 = vpop.f32.mrf.mxu0
        %1130 = vmatprep.mubr.f32.mxu0 %v666
        %1131 = vmatmul.mubr.f32.gmra.mxu0 %v664
        %v1132 = vpop.f32.mrf.mxu0
        %v1133 = vadd.f32 0.0, %v1132
        %v1134 = vpop.f32.mrf.mxu0
        %1135 = vmatprep.mubr.f32.mxu0 %v672
        %1136 = vmatmul.mubr.f32.gmra.mxu0 %v670
        %v1137 = vpop.f32.mrf.mxu0
        %v1138 = vadd.f32 0.0, %v1137
        %v1139 = vpop.f32.mrf.mxu0
        %1140 = vmatprep.mubr.f32.mxu0 %v676
        %1141 = vmatmul.mubr.f32.gmra.mxu0 %v674
        %v1142 = vpop.f32.mrf.mxu0
        %v1143 = vadd.f32 0.0, %v1142
        %v1144 = vpop.f32.mrf.mxu0
        %1145 = vmatprep.mubr.f32.mxu0 %v682
        %1146 = vmatmul.mubr.f32.gmra.mxu0 %v680
        %v1147 = vpop.f32.mrf.mxu0
        %v1148 = vadd.f32 0.0, %v1147
        %v1149 = vpop.f32.mrf.mxu0
        %1150 = vmatprep.mubr.f32.mxu0 %v686
        %1151 = vmatmul.mubr.f32.gmra.mxu0 %v684
        %v1152 = vpop.f32.mrf.mxu0
        %v1153 = vadd.f32 0.0, %v1152
        %v1154 = vpop.f32.mrf.mxu0
        %1155 = vmatprep.mubr.f32.mxu0 %v692
        %1156 = vmatmul.mubr.f32.gmra.mxu0 %v690
        %v1157 = vpop.f32.mrf.mxu0
        %v1158 = vadd.f32 0.0, %v1157
        %v1159 = vpop.f32.mrf.mxu0
        %1160 = vmatprep.mubr.f32.mxu0 %v696
        %1161 = vmatmul.mubr.f32.gmra.mxu0 %v694
        %v1162 = vpop.f32.mrf.mxu0
        %v1163 = vadd.f32 0.0, %v1162
        %v1164 = vpop.f32.mrf.mxu0
        %1165 = vmatprep.mubr.f32.mxu0 %v702
        %1166 = vmatmul.mubr.f32.gmra.mxu0 %v700
        %v1167 = vpop.f32.mrf.mxu0
        %v1168 = vadd.f32 0.0, %v1167
        %v1169 = vpop.f32.mrf.mxu0
        %1170 = vmatprep.mubr.f32.mxu0 %v706
        %1171 = vmatmul.mubr.f32.gmra.mxu0 %v704
        %v1172 = vpop.f32.mrf.mxu0
        %v1173 = vadd.f32 0.0, %v1172
        %v1174 = vpop.f32.mrf.mxu0
        %1175 = vmatprep.mubr.f32.mxu0 %v712
        %1176 = vmatmul.mubr.f32.gmra.mxu0 %v710
        %v1177 = vpop.f32.mrf.mxu0
        %v1178 = vadd.f32 0.0, %v1177
        %v1179 = vpop.f32.mrf.mxu0
        %1180 = vmatprep.mubr.f32.mxu0 %v716
        %1181 = vmatmul.mubr.f32.gmra.mxu0 %v714
        %v1182 = vpop.f32.mrf.mxu0
        %v1183 = vadd.f32 0.0, %v1182
        %v1184 = vpop.f32.mrf.mxu0
        %1185 = vdwg.mxu0
        %v1186 = vxor.u32 %v1108, 2147483648
        %v1187 = vxor.u32 %v1113, 2147483648
        %v1188 = vxor.u32 %v1118, 2147483648
        %v1189 = vxor.u32 %v1123, 2147483648
        %v1190 = vxor.u32 %v1128, 2147483648
        %v1191 = vxor.u32 %v1133, 2147483648
        %v1192 = vxor.u32 %v1138, 2147483648
        %v1193 = vxor.u32 %v1143, 2147483648
        %v1194 = vxor.u32 %v1148, 2147483648
        %v1195 = vxor.u32 %v1153, 2147483648
        %v1196 = vxor.u32 %v1158, 2147483648
        %v1197 = vxor.u32 %v1163, 2147483648
        %v1198 = vxor.u32 %v1168, 2147483648
        %v1199 = vxor.u32 %v1173, 2147483648
        %v1200 = vxor.u32 %v1178, 2147483648
        %v1201 = vxor.u32 %v1183, 2147483648
        %v1202 = vmul.f32 %v1186, 1.442695
        %v1203 = vpow.pop %v1202
        %v1204 = vmul.f32 %v1187, 1.442695
        %v1205 = vpow.pop %v1204
        %v1206 = vmul.f32 %v1188, 1.442695
        %v1207 = vpow.pop %v1206
        %v1208 = vmul.f32 %v1189, 1.442695
        %v1209 = vpow.pop %v1208
        %v1210 = vmul.f32 %v1190, 1.442695
        %v1211 = vpow.pop %v1210
        %v1212 = vmul.f32 %v1191, 1.442695
        %v1213 = vpow.pop %v1212
        %v1214 = vmul.f32 %v1192, 1.442695
        %v1215 = vpow.pop %v1214
        %v1216 = vmul.f32 %v1193, 1.442695
        %v1217 = vpow.pop %v1216
        %v1218 = vmul.f32 %v1194, 1.442695
        %v1219 = vpow.pop %v1218
        %v1220 = vmul.f32 %v1195, 1.442695
        %v1221 = vpow.pop %v1220
        %v1222 = vmul.f32 %v1196, 1.442695
        %v1223 = vpow.pop %v1222
        %v1224 = vmul.f32 %v1197, 1.442695
        %v1225 = vpow.pop %v1224
        %v1226 = vmul.f32 %v1198, 1.442695
        %v1227 = vpow.pop %v1226
        %v1228 = vmul.f32 %v1199, 1.442695
        %v1229 = vpow.pop %v1228
        %v1230 = vmul.f32 %v1200, 1.442695
        %v1231 = vpow.pop %v1230
        %v1232 = vmul.f32 %v1201, 1.442695
        %v1233 = vpow.pop %v1232
        %v1234 = vadd.f32 %v1203, 1.0
        %v1235 = vadd.f32 %v1205, 1.0
        %v1236 = vadd.f32 %v1207, 1.0
        %v1237 = vadd.f32 %v1209, 1.0
        %v1238 = vadd.f32 %v1211, 1.0
        %v1239 = vadd.f32 %v1213, 1.0
        %v1240 = vadd.f32 %v1215, 1.0
        %v1241 = vadd.f32 %v1217, 1.0
        %v1242 = vadd.f32 %v1219, 1.0
        %v1243 = vadd.f32 %v1221, 1.0
        %v1244 = vadd.f32 %v1223, 1.0
        %v1245 = vadd.f32 %v1225, 1.0
        %v1246 = vadd.f32 %v1227, 1.0
        %v1247 = vadd.f32 %v1229, 1.0
        %v1248 = vadd.f32 %v1231, 1.0
        %v1249 = vadd.f32 %v1233, 1.0
        %v1250 = vrcp.pop %v1234
        %v1251 = vmul.f32 1.0, %v1250
        %v1252 = vrcp.pop %v1235
        %v1253 = vmul.f32 1.0, %v1252
        %v1254 = vrcp.pop %v1236
        %v1255 = vmul.f32 1.0, %v1254
        %v1256 = vrcp.pop %v1237
        %v1257 = vmul.f32 1.0, %v1256
        %v1258 = vrcp.pop %v1238
        %v1259 = vmul.f32 1.0, %v1258
        %v1260 = vrcp.pop %v1239
        %v1261 = vmul.f32 1.0, %v1260
        %v1262 = vrcp.pop %v1240
        %v1263 = vmul.f32 1.0, %v1262
        %v1264 = vrcp.pop %v1241
        %v1265 = vmul.f32 1.0, %v1264
        %v1266 = vrcp.pop %v1242
        %v1267 = vmul.f32 1.0, %v1266
        %v1268 = vrcp.pop %v1243
        %v1269 = vmul.f32 1.0, %v1268
        %v1270 = vrcp.pop %v1244
        %v1271 = vmul.f32 1.0, %v1270
        %v1272 = vrcp.pop %v1245
        %v1273 = vmul.f32 1.0, %v1272
        %v1274 = vrcp.pop %v1246
        %v1275 = vmul.f32 1.0, %v1274
        %v1276 = vrcp.pop %v1247
        %v1277 = vmul.f32 1.0, %v1276
        %v1278 = vrcp.pop %v1248
        %v1279 = vmul.f32 1.0, %v1278
        %v1280 = vrcp.pop %v1249
        %v1281 = vmul.f32 1.0, %v1280
        %1282 = vst [vmem:[%s250] sm:$0xff] %v1251
        %1283 = vst [vmem:[%s250 + $0x8] sm:$0xff] %v1253
        %1284 = vst [vmem:[%s250 + $0x10] sm:$0xff] %v1255
        %1285 = vst [vmem:[%s250 + $0x18] sm:$0xff] %v1257
        %1286 = vst [vmem:[%s250 + $0x20] sm:$0xff] %v1259
        %1287 = vst [vmem:[%s250 + $0x28] sm:$0xff] %v1261
        %1288 = vst [vmem:[%s250 + $0x30] sm:$0xff] %v1263
        %1289 = vst [vmem:[%s250 + $0x38] sm:$0xff] %v1265
        %1290 = vst [vmem:[%s250 + $0x40] sm:$0xff] %v1267
        %1291 = vst [vmem:[%s250 + $0x48] sm:$0xff] %v1269
        %1292 = vst [vmem:[%s250 + $0x50] sm:$0xff] %v1271
        %1293 = vst [vmem:[%s250 + $0x58] sm:$0xff] %v1273
        %1294 = vst [vmem:[%s250 + $0x60] sm:$0xff] %v1275
        %1295 = vst [vmem:[%s250 + $0x68] sm:$0xff] %v1277
        %1296 = vst [vmem:[%s250 + $0x70] sm:$0xff] %v1279
        %1297 = vst [vmem:[%s250 + $0x78] sm:$0xff] %v1281
        %p1298 = scmp.lt.s32.totalorder %s23, 1
        %s1299 = scalar_select %p1298, %s23, 1
        %s1300 = smul.addr %s1299, 16
        %s1301 = smul.addr %s1300, 8
        %s1302 = scalar_lea.vmem %s3, %s1301
        %s1303 = sand.u32 %s125, 1
        %s1304 = scalar_lea.sflag [#allocation4], %s1303
        %s1305 = sand.u32 %s125, 1
        %s1306 = smul.addr %s1305, 128
        %s1307 = scalar_lea.vmem [#allocation8], %s1306
        // Predicated region
        $region45: #{tpu_custom_call.1} parent=31 // pred_check
          %p1308 = pneg %p109
        $region46: #{tpu_custom_call.1} parent=31 // pred_check_branch
          %1310 = sbr.rel (%p1308) target = $region48
        $region47: #{tpu_custom_call.1} parent=31 // pred_region
          _
        $region48: #{tpu_custom_call.1} parent=31 // pred_fallthru
          _
        // Predicated region
        $region49: #{tpu_custom_call.1} parent=31 // pred_check
          %p1311 = pneg %p135
        $region50: #{tpu_custom_call.1} parent=31 // pred_check_branch
          %1313 = sbr.rel (%p1311) target = $region52
        $region51: #{tpu_custom_call.1} parent=31 // pred_region
          %s1315 = ssub.s32 2048, 2048
          %1316 = vsyncadd %s1304, %s1315
          %s1317 = smul.addr %s23, 16
          %s1318 = smul.addr %s1317, 128
          %s1319 = scalar_lea.hbm %s4, %s1318
          %s1320 = sshll.u32 %s1307, 4
          %s1321 = int_to_ptr.vmem [resolvable:$true] %s1320
          %1326 = dma.vmem_to_hbm [thread:$0]  %s1321, 2048, %s1319, %s1304, 128, 128, 8
        $region52: #{tpu_custom_call.1} parent=31 // pred_fallthru
          _
      $region32: #{tpu_custom_call.1} parent=5 // pred_fallthru
        _
      %p1327 = scmp.le.s32.totalorder 2, %s18
      // Predicated region
      $region53: #{tpu_custom_call.1} parent=5 // pred_check
        %p1328 = pneg %p1327
      $region54: #{tpu_custom_call.1} parent=5 // pred_check_branch
        %1330 = sbr.rel (%p1328) target = $region56
      $region55: #{tpu_custom_call.1} parent=5 // pred_region
        %s1331 = ssub.s32 %s18, 2
        // Predicated region
        $region57: #{tpu_custom_call.1} parent=55 // pred_check
          %p1332 = pneg %p115
        $region58: #{tpu_custom_call.1} parent=55 // pred_check_branch
          %1334 = sbr.rel (%p1332) target = $region60
        $region59: #{tpu_custom_call.1} parent=55 // pred_region
          %p1335 = scmp.lt.s32.totalorder %s24, 1
          %s1336 = scalar_select %p1335, %s24, 1
          %s1337 = smul.addr %s1336, 16
          %s1338 = smul.addr %s1337, 8
          %s1339 = scalar_lea.vmem %s3, %s1338
        $region60: #{tpu_custom_call.1} parent=55 // pred_fallthru
          _
        // Predicated region
        $region61: #{tpu_custom_call.1} parent=55 // pred_check
          %p1340 = pneg %p141
        $region62: #{tpu_custom_call.1} parent=55 // pred_check_branch
          %1342 = sbr.rel (%p1340) target = $region64
        $region63: #{tpu_custom_call.1} parent=55 // pred_region
          %s1343 = sand.u32 %s126, 1
          %s1344 = scalar_lea.sflag [#allocation4], %s1343
          %s1345 = sand.u32 %s126, 1
          %s1346 = smul.addr %s1345, 128
          %s1347 = scalar_lea.vmem [#allocation8], %s1346
          %1348 = dma.done %s1344, 2048
        $region64: #{tpu_custom_call.1} parent=55 // pred_fallthru
          _
      $region56: #{tpu_custom_call.1} parent=5 // pred_fallthru
        _
    $region6: #{tpu_custom_call.1} parent=1 // loop_footer
      %s22 = sadd.s32 1, %s18
    $region7: #{tpu_custom_call.1} parent=1 // loop_footer_branch
      %17 = sbr.rel target = $region3
    $region8: #{tpu_custom_call.1} parent=1 // loop_exit
      _
    %1349 = vsyncpa [#allocation3], 1
    %s1350 = scalar_lea.sflag [#allocation3], 1
    %1351 = vsyncpa %s1350, 1
    %1352 = vsyncpa [#allocation6], 1
    %1353 = vsyncpa [#allocation4], 1
    %s1354 = scalar_lea.sflag [#allocation4], 1
    %1355 = vsyncpa %s1354, 1

</llo_original>
